<compile_context>
chip_gen: v7x
topology: tpu7x:2x2x1
jax: 0.10.0
libtpu: 0.0.40
codegen_flags: <defaults>
</compile_context>

<pallas_src>
import functools

import jax
import jax.numpy as jnp
from jax.experimental import pallas as pl
from jax.experimental.pallas import tpu as pltpu

_LANE = 128
_CHUNK_ROWS = 256  # inner compute chunk (rows): ~1 MiB of live f32 temporaries


def _ceil_div(a, b):
    return -(-a // b)


def _round_up(a, b):
    return _ceil_div(a, b) * b


def _static_pow(x, gamma):
    """x**gamma with a static exponent; plain multiplies for small int gamma."""
    g = float(gamma)
    if g == int(g) and 0 <= int(g) <= 16:
        gi = int(g)
        if gi == 0:
            return jnp.ones_like(x)
        r = x
        for _ in range(gi - 1):
            r = r * x
        return r
    return jnp.power(x, jnp.float32(g))


def _focal_from_probs(p1, tgt, alpha, gamma):
    """Per-sample focal loss given P(class==1) and integer targets."""
    is_pos = tgt == 1
    probs = jnp.where(is_pos, p1, 1.0 - p1)
    probs = jnp.clip(probs, 0.0001, 1.0)
    log_p = jnp.log(probs)
    a = jnp.where(is_pos, jnp.float32(alpha), jnp.float32(1.0 - alpha))
    return -a * _static_pow(1.0 - probs, gamma) * log_p


def _binary_kernel(pred_ref, tgt_ref, out_ref, *, alpha, gamma, n_valid,
                   tile_rows, chunk_rows):
    """C == 2 path.

    pred_ref: (tile_rows, 256) block of the copy-free (rows, 2*128) view of
              pred: lane 2k holds logit-0, lane 2k+1 holds logit-1 of the
              sample at (row, k).
    tgt_ref:  (tile_rows, 128) block of targets (native integer dtype).
    out_ref:  (8, 128) lane-dense partial sum for this tile.
    """
    i = pl.program_id(0)
    tile_base = i * (tile_rows * _LANE)

    # +-1 de-interleave matrix: d = x @ dmat gives (l1 - l0) per sample.
    # Built from iotas each step (cheap VPU work, ~128 KiB, no extra HBM
    # traffic); the MXU is otherwise idle in this kernel.
    j = jax.lax.broadcasted_iota(jnp.int32, (2 * _LANE, _LANE), 0)
    k = jax.lax.broadcasted_iota(jnp.int32, (2 * _LANE, _LANE), 1)
    dmat = (jnp.where(j == 2 * k + 1, 1.0, 0.0)
            - jnp.where(j == 2 * k, 1.0, 0.0))

    def chunk_partial(base):
        x = pred_ref[pl.ds(base, chunk_rows), :].astype(jnp.float32)
        tgt = tgt_ref[pl.ds(base, chunk_rows), :]

        # softmax(pred, 1)[:, 1] for two classes == sigmoid(l1 - l0).
        d = jax.lax.dot_general(
            x, dmat, (((1,), (0,)), ((), ())),
            precision=jax.lax.Precision.HIGHEST,
            preferred_element_type=jnp.float32)              # (chunk, 128)
        p1 = 0.5 * (jnp.tanh(0.5 * d) + 1.0)                 # 1 EUP op

        loss = _focal_from_probs(p1, tgt, alpha, gamma)      # (chunk, 128)

        # Mask padded / grid-overrun samples.  Only the last tile can contain
        # any; the check is a few cheap VPU ops/elem so the kernel stays
        # HBM-bound on every generation.
        row = jax.lax.broadcasted_iota(jnp.int32, loss.shape, 0)
        lane = jax.lax.broadcasted_iota(jnp.int32, loss.shape, 1)
        flat = tile_base + (base + row) * _LANE + lane        # int32: N < 2^31
        loss = jnp.where(flat < n_valid, loss, 0.0)

        # VPU-only fold of the chunk into an (8, 128) partial.
        return jnp.sum(loss.reshape(chunk_rows // 8, 8, _LANE), axis=0)

    nchunks = tile_rows // chunk_rows
    if nchunks == 1:
        out_ref[...] = chunk_partial(0)
    else:
        # fori_loop (not an unrolled Python loop) bounds the live f32
        # temporaries to one chunk regardless of tile size (v7x 64 MiB safe).
        def body(s, acc):
            base = pl.multiple_of(s * chunk_rows, chunk_rows)
            return acc + chunk_partial(base)

        out_ref[...] = jax.lax.fori_loop(
            0, nchunks, body, jnp.zeros((8, _LANE), jnp.float32))


def _multiclass_kernel(pred_ref, tgt_ref, out_ref, *, alpha, gamma, n_valid,
                       tile_rows):
    """Fallback for C > 2 (the module is binary; this path is rarely used)."""
    i = pl.program_id(0)
    logits = pred_ref[...].astype(jnp.float32)                # (C, tr, 128)
    m = jnp.max(logits, axis=0)
    e = jnp.exp(logits - m)
    p1 = e[1] / jnp.sum(e, axis=0)

    loss = _focal_from_probs(p1, tgt_ref[...], alpha, gamma)

    row = jax.lax.broadcasted_iota(jnp.int32, loss.shape, 0)
    lane = jax.lax.broadcasted_iota(jnp.int32, loss.shape, 1)
    flat = (i * tile_rows + row) * _LANE + lane
    loss = jnp.where(flat < n_valid, loss, 0.0)

    out_ref[...] = jnp.sum(loss.reshape(tile_rows // 8, 8, _LANE), axis=0)


def _binary_call(pred, tgt, n, alpha, gamma, tile_rows):
    rows = _ceil_div(n, _LANE)
    rows_p = _round_up(rows, 8) if rows < 16 else rows

    # Tile sizing: multiple of 8 rows (or full dim for tiny inputs); multiple
    # of the inner chunk once tiles get big; >= 2 grid steps whenever N allows
    # (v7x has 2 TensorCores to shard the "parallel" axis across).
    if rows_p <= 16:
        tr = rows_p
    elif rows_p <= 2 * _CHUNK_ROWS:
        tr = _round_up(_ceil_div(rows_p, 2), 8)
    else:
        cap = max(_CHUNK_ROWS, (int(tile_rows) // _CHUNK_ROWS) * _CHUNK_ROWS)
        tr = min(cap, _ceil_div(rows_p, 2 * _CHUNK_ROWS) * _CHUNK_ROWS)
    chunk = min(_CHUNK_ROWS, tr)
    num_tiles = _ceil_div(rows_p, tr)

    # Copy-free layout: row-major (N, 2) -> (rows, 256) is a pure view when
    # N % 128 == 0 (pred keeps its input dtype; upcast to f32 in-kernel).  A
    # pad is only materialized for the ragged sub-128 tail / tiny inputs; the
    # row-tile remainder is handled by Pallas grid overrun + in-kernel mask.
    pad = rows_p * _LANE - n
    pred_in, tgt_in = pred, tgt
    if pad:
        pred_in = jnp.pad(pred_in, ((0, pad), (0, 0)))
        tgt_in = jnp.pad(tgt_in, (0, pad))
    pred_slab = pred_in.reshape(rows_p, 2 * _LANE)
    tgt_slab = tgt_in.reshape(rows_p, _LANE)

    kernel = functools.partial(
        _binary_kernel, alpha=float(alpha), gamma=float(gamma),
        n_valid=int(n), tile_rows=tr, chunk_rows=chunk)

    return pl.pallas_call(
        kernel,
        out_shape=jax.ShapeDtypeStruct((num_tiles * 8, _LANE), jnp.float32),
        grid_spec=pltpu.PrefetchScalarGridSpec(
            num_scalar_prefetch=0,
            grid=(num_tiles,),
            in_specs=[
                pl.BlockSpec((tr, 2 * _LANE), lambda i: (i, 0)),
                pl.BlockSpec((tr, _LANE), lambda i: (i, 0)),
            ],
            out_specs=pl.BlockSpec((8, _LANE), lambda i: (i, 0)),
        ),
        compiler_params=pltpu.CompilerParams(
            dimension_semantics=("parallel",)),
    )(pred_slab, tgt_slab)


def _multiclass_call(pred, tgt, n, c, alpha, gamma, tile_rows):
    # TODO(synk): this fallback still materializes a transposed copy of pred;
    # the module is documented as binary so the C > 2 path is kept simple.
    rows = _ceil_div(n, _LANE)
    tr_cap = max(8, ((4096 // c) // 8) * 8)        # keep pred block ~<= 2 MiB
    tr = min(min(int(tile_rows), tr_cap), max(8, _round_up(rows, 8)))
    tr = max(8, (tr // 8) * 8)
    rows_pad = _round_up(rows, tr)
    num_tiles = rows_pad // tr
    pad = rows_pad * _LANE - n

    pred_in = jnp.pad(pred, ((0, pad), (0, 0))) if pad else pred
    tgt_in = jnp.pad(tgt, (0, pad)) if pad else tgt
    pred_slab = pred_in.T.reshape(c, rows_pad, _LANE)
    tgt_slab = tgt_in.reshape(rows_pad, _LANE)

    kernel = functools.partial(
        _multiclass_kernel, alpha=float(alpha), gamma=float(gamma),
        n_valid=int(n), tile_rows=tr)

    return pl.pallas_call(
        kernel,
        out_shape=jax.ShapeDtypeStruct((num_tiles * 8, _LANE), jnp.float32),
        grid_spec=pltpu.PrefetchScalarGridSpec(
            num_scalar_prefetch=0,
            grid=(num_tiles,),
            in_specs=[
                pl.BlockSpec((c, tr, _LANE), lambda i: (0, i, 0)),
                pl.BlockSpec((tr, _LANE), lambda i: (i, 0)),
            ],
            out_specs=pl.BlockSpec((8, _LANE), lambda i: (i, 0)),
        ),
        compiler_params=pltpu.CompilerParams(
            dimension_semantics=("parallel",)),
    )(pred_slab, tgt_slab)


def focal_loss(pred, target, *, alpha=0.4, gamma=2, size_average=True,
               tile_rows=2048):
    """pred: (N, C) float logits (C >= 2). target: (N,) ints in {0, 1}."""
    n, c = pred.shape

    tgt = target.reshape(-1)
    if not jnp.issubdtype(tgt.dtype, jnp.integer):
        tgt = tgt.astype(jnp.int32)

    if c == 2:
        partials = _binary_call(pred, tgt, n, alpha, gamma, tile_rows)
    else:
        partials = _multiclass_call(pred, tgt, n, c, alpha, gamma, tile_rows)

    total = jnp.sum(partials)
    if size_average:
        return total / jnp.float32(n)
    return total


def _focal_loss_ref(pred, target, alpha=0.4, gamma=2, size_average=True):
    """Pure-JAX reference mirroring the PyTorch forward."""
    p = jax.nn.softmax(pred.astype(jnp.float32), axis=1)[:, 1]
    t = target.astype(jnp.int32)
    probs = jnp.where(t == 1, p, 1.0 - p)
    probs = jnp.clip(probs, 0.0001, 1.0)
    a = jnp.where(t == 1, alpha, 1.0 - alpha)
    batch_loss = -a * jnp.power(1.0 - probs, gamma) * jnp.log(probs)
    return jnp.mean(batch_loss) if size_average else jnp.sum(batch_loss)


if __name__ == "__main__":
    key = jax.random.PRNGKey(0)
    k1, k2 = jax.random.split(key)

    # Binary classification: N samples, 2 logits each.
    N, C = 200, 2
    pred = jax.random.normal(k1, (N, C), dtype=jnp.float32)
    target = jax.random.bernoulli(k2, 0.5, (N,)).astype(jnp.int32)

    out_mean = jax.block_until_ready(
        focal_loss(pred, target, alpha=0.4, gamma=2, size_average=True))
    out_sum = jax.block_until_ready(
        focal_loss(pred, target, alpha=0.4, gamma=2, size_average=False))

    ref_mean = _focal_loss_ref(pred, target, 0.4, 2, True)
    ref_sum = _focal_loss_ref(pred, target, 0.4, 2, False)

    assert jnp.allclose(out_mean, ref_mean, rtol=1e-5, atol=1e-5), (out_mean, ref_mean)
    assert jnp.allclose(out_sum, ref_sum, rtol=1e-5, atol=1e-4), (out_sum, ref_sum)

    # Multi-tile path: zero-copy reshape (N % 128 == 0), 2 grid steps, the
    # last tile only partially valid (grid-overrun rows masked in-kernel).
    N2 = 2176  # 17 * 128
    k3, k4 = jax.random.split(k2)
    pred2 = jax.random.normal(k3, (N2, C), dtype=jnp.float32)
    target2 = jax.random.bernoulli(k4, 0.5, (N2,)).astype(jnp.int32)
    out2 = jax.block_until_ready(focal_loss(pred2, target2))
    ref2 = _focal_loss_ref(pred2, target2)
    assert jnp.allclose(out2, ref2, rtol=1e-5, atol=1e-5), (out2, ref2)

    print("KERNEL_OK")
</pallas_src>

<mosaic_0001>
module attributes {stable_mosaic.version = 11 : i64} {
  func.func @_binary_kernel(%arg0: i32, %arg1: memref<8x256xf32, #tpu.memory_space<vmem>>, %arg2: memref<8x128xi32, #tpu.memory_space<vmem>>, %arg3: memref<8x128xf32, #tpu.memory_space<vmem>>) attributes {dimension_semantics = [#tpu.dimension_semantics<parallel>], iteration_bounds = array<i64: 1>, scalar_prefetch = 0 : i64, scratch_operands = 0 : i64, tpu.core_type = #tpu.core_type<tc>, window_params = [{transform_indices = @transform_0, window_bounds = array<i64: 8, 256>}, {transform_indices = @transform_1, window_bounds = array<i64: 8, 128>}, {transform_indices = @transform_2, window_bounds = array<i64: 8, 128>}]} {
    %c1024_i32 = arith.constant 1024 : i32
    %0 = arith.muli %arg0, %c1024_i32 : i32
    %1 = tpu.iota {dimensions = array<i32: 0>} : vector<256x128xi32>
    %2 = tpu.iota {dimensions = array<i32: 1>} : vector<256x128xi32>
    %c2_i32 = arith.constant 2 : i32
    %3 = vector.broadcast %c2_i32 : i32 to vector<256x128xi32>
    %4 = arith.muli %3, %2 : vector<256x128xi32>
    %c1_i32 = arith.constant 1 : i32
    %5 = vector.broadcast %c1_i32 : i32 to vector<256x128xi32>
    %6 = arith.addi %4, %5 : vector<256x128xi32>
    %7 = arith.cmpi eq, %1, %6 : vector<256x128xi32>
    %cst = arith.constant 1.000000e+00 : f32
    %cst_0 = arith.constant 0.000000e+00 : f32
    %8 = vector.broadcast %cst : f32 to vector<256x128xf32>
    %9 = vector.broadcast %cst_0 : f32 to vector<256x128xf32>
    %10 = arith.select %7, %8, %9 : vector<256x128xi1>, vector<256x128xf32>
    %c2_i32_1 = arith.constant 2 : i32
    %11 = vector.broadcast %c2_i32_1 : i32 to vector<256x128xi32>
    %12 = arith.muli %11, %2 : vector<256x128xi32>
    %13 = arith.cmpi eq, %1, %12 : vector<256x128xi32>
    %cst_2 = arith.constant 1.000000e+00 : f32
    %cst_3 = arith.constant 0.000000e+00 : f32
    %14 = vector.broadcast %cst_2 : f32 to vector<256x128xf32>
    %15 = vector.broadcast %cst_3 : f32 to vector<256x128xf32>
    %16 = arith.select %13, %14, %15 : vector<256x128xi1>, vector<256x128xf32>
    %17 = arith.subf %10, %16 : vector<256x128xf32>
    %c0 = arith.constant 0 : index
    %c0_4 = arith.constant 0 : index
    %18 = vector.load %arg1[%c0, %c0_4] : memref<8x256xf32, #tpu.memory_space<vmem>>, vector<8x256xf32>
    %c0_5 = arith.constant 0 : index
    %c0_6 = arith.constant 0 : index
    %19 = vector.load %arg2[%c0_5, %c0_6] : memref<8x128xi32, #tpu.memory_space<vmem>>, vector<8x128xi32>
    %cst_7 = arith.constant dense<0.000000e+00> : vector<8x128xf32>
    %20 = tpu.matmul %18, %17, %cst_7 {dimension_numbers = #tpu.dot_dimension_numbers<[1], [0], [0], [1], [0, 0, 1, 1], [], []>, precision = #tpu.contract_precision<fp32>} : vector<8x256xf32>, vector<256x128xf32>, vector<8x128xf32> -> vector<8x128xf32>
    %cst_8 = arith.constant 5.000000e-01 : f32
    %21 = vector.broadcast %cst_8 : f32 to vector<8x128xf32>
    %22 = arith.mulf %21, %20 : vector<8x128xf32>
    %23 = math.tanh %22 : vector<8x128xf32>
    %cst_9 = arith.constant 1.000000e+00 : f32
    %24 = vector.broadcast %cst_9 : f32 to vector<8x128xf32>
    %25 = arith.addf %23, %24 : vector<8x128xf32>
    %cst_10 = arith.constant 5.000000e-01 : f32
    %26 = vector.broadcast %cst_10 : f32 to vector<8x128xf32>
    %27 = arith.mulf %26, %25 : vector<8x128xf32>
    %c1_i32_11 = arith.constant 1 : i32
    %28 = vector.broadcast %c1_i32_11 : i32 to vector<8x128xi32>
    %29 = arith.cmpi eq, %19, %28 : vector<8x128xi32>
    %cst_12 = arith.constant 1.000000e+00 : f32
    %30 = vector.broadcast %cst_12 : f32 to vector<8x128xf32>
    %31 = arith.subf %30, %27 : vector<8x128xf32>
    %32 = arith.select %29, %27, %31 : vector<8x128xi1>, vector<8x128xf32>
    %cst_13 = arith.constant 9.99999974E-5 : f32
    %cst_14 = arith.constant 1.000000e+00 : f32
    %33 = vector.broadcast %cst_13 : f32 to vector<8x128xf32>
    %34 = arith.maximumf %33, %32 : vector<8x128xf32>
    %35 = vector.broadcast %cst_14 : f32 to vector<8x128xf32>
    %36 = arith.minimumf %35, %34 : vector<8x128xf32>
    %37 = math.log %36 : vector<8x128xf32>
    %cst_15 = arith.constant 4.000000e-01 : f32
    %cst_16 = arith.constant 6.000000e-01 : f32
    %38 = vector.broadcast %cst_15 : f32 to vector<8x128xf32>
    %39 = vector.broadcast %cst_16 : f32 to vector<8x128xf32>
    %40 = arith.select %29, %38, %39 : vector<8x128xi1>, vector<8x128xf32>
    %cst_17 = arith.constant 0.000000e+00 : f32
    %41 = vector.broadcast %cst_17 : f32 to vector<8x128xf32>
    %42 = arith.subf %41, %40 : vector<8x128xf32>
    %cst_18 = arith.constant 1.000000e+00 : f32
    %43 = vector.broadcast %cst_18 : f32 to vector<8x128xf32>
    %44 = arith.subf %43, %36 : vector<8x128xf32>
    %45 = arith.mulf %44, %44 : vector<8x128xf32>
    %46 = arith.mulf %42, %45 : vector<8x128xf32>
    %47 = arith.mulf %46, %37 : vector<8x128xf32>
    %48 = tpu.iota {dimensions = array<i32: 0>} : vector<8x128xi32>
    %49 = tpu.iota {dimensions = array<i32: 1>} : vector<8x128xi32>
    %c0_i32 = arith.constant 0 : i32
    %50 = vector.broadcast %c0_i32 : i32 to vector<8x128xi32>
    %51 = arith.addi %50, %48 : vector<8x128xi32>
    %c128_i32 = arith.constant 128 : i32
    %52 = vector.broadcast %c128_i32 : i32 to vector<8x128xi32>
    %53 = arith.muli %51, %52 : vector<8x128xi32>
    %54 = vector.broadcast %0 : i32 to vector<8x128xi32>
    %55 = arith.addi %54, %53 : vector<8x128xi32>
    %56 = arith.addi %55, %49 : vector<8x128xi32>
    %c200_i32 = arith.constant 200 : i32
    %57 = vector.broadcast %c200_i32 : i32 to vector<8x128xi32>
    %58 = arith.cmpi slt, %56, %57 : vector<8x128xi32>
    %cst_19 = arith.constant 0.000000e+00 : f32
    %59 = vector.broadcast %cst_19 : f32 to vector<8x128xf32>
    %60 = arith.select %58, %47, %59 : vector<8x128xi1>, vector<8x128xf32>
    %61 = vector.shape_cast %60 : vector<8x128xf32> to vector<1x8x128xf32>
    %cst_20 = arith.constant dense<0.000000e+00> : vector<8x128xf32>
    %62 = vector.multi_reduction <add>, %61, %cst_20 [0] : vector<1x8x128xf32> to vector<8x128xf32>
    %c0_21 = arith.constant 0 : index
    %c0_22 = arith.constant 0 : index
    %63 = vector.load %arg3[%c0_21, %c0_22] : memref<8x128xf32, #tpu.memory_space<vmem>>, vector<8x128xf32>
    tpu.vector_store %arg3[%c0_21, %c0_22], %62 {strides = array<i32>} : memref<8x128xf32, #tpu.memory_space<vmem>>, vector<8x128xf32>,
    return
  }
  func.func @transform_0(%arg0: i32) -> (i32, i32) {
    %c0_i32 = arith.constant 0 : i32
    %c0_i32_0 = arith.constant 0 : i32
    return %arg0, %c0_i32 : i32, i32
  }
  func.func @transform_1(%arg0: i32) -> (i32, i32) {
    %c0_i32 = arith.constant 0 : i32
    %c0_i32_0 = arith.constant 0 : i32
    return %arg0, %c0_i32 : i32, i32
  }
  func.func @transform_2(%arg0: i32) -> (i32, i32) {
    %c0_i32 = arith.constant 0 : i32
    %c0_i32_0 = arith.constant 0 : i32
    return %arg0, %c0_i32 : i32, i32
  }
}

</mosaic_0001>

<llo_original>
// kernel: tpu_custom_call.1
$region0: #{tpu_custom_call.1}
  #allocation0 [shape = 'u32[]', space=smem, size = 0x4, offset = 0x4, fixed_abs, tag = 'smem constant byte address 0x4 - core index']
  #allocation1 [shape = 'u32[144,128]{1,0:T(1,128)}', space=vmem, size = 0x12000, scoped, tag = 'internal scratch']
  %s0 = inlined_call_operand.hbm [shape: f32[8,256], index: 0, kind: input, shape index: {}]
  %s1 = inlined_call_operand.hbm [shape: s32[8,128], index: 1, kind: input, shape index: {}]
  %s2 = inlined_call_operand.hbm [shape: f32[8,128], index: 2, kind: output, shape index: {}]
  %s3 = sld [smem:[#allocation0]]
  $region26: #{tpu_custom_call.1} parent=0
    _
  %s5 = ssub.s32 1, %s3
  %s6 = scalar_select 0, %s5, %s3
  $region1: #{tpu_custom_call.1} parent=0
    #allocation2 [shape = 'u8[8192]{0}', space=vmem, size = 0x2000, scoped, tag = 'input window, operand 0, single buffered']
    #allocation3 [shape = 's32[1]{0}', space=sflag, size = 0x4, scoped, tag = 'scoped memory for tpu_custom_call.1']
    #allocation4 [shape = 's32[1]{0}', space=sflag, size = 0x4, scoped, tag = 'scoped memory for tpu_custom_call.1']
    #allocation5 [shape = 'u8[4096]{0}', space=vmem, size = 0x1000, scoped, tag = 'input window, operand 1, single buffered']
    #allocation6 [shape = 's32[1]{0}', space=sflag, size = 0x4, scoped, tag = 'scoped memory for tpu_custom_call.1']
    #allocation7 [shape = 'u8[4096]{0}', space=vmem, size = 0x1000, scoped, tag = 'output window, operand 0, single buffered']
    %7 = vsyncpa [#allocation3], 0
    %8 = vsyncpa [#allocation6], 0
    %9 = vsyncpa [#allocation4], 0
    // Predicated region
    $region2: #{tpu_custom_call.1} parent=1 // pred_check
      _
    $region3: #{tpu_custom_call.1} parent=1 // pred_check_branch
      %11 = sbr.rel (0) target = $region5
    $region4: #{tpu_custom_call.1} parent=1 // pred_region
      %s13 = ssub.s32 256, 256
      %14 = vsyncadd [#allocation3], %s13
      %s16 = sshll.u32 [#allocation2], 4
      %s17 = int_to_ptr.vmem [resolvable:$true] %s16
      %19 = dma.hbm_to_vmem [thread:$0]  %s0, 256, %s17, [#allocation3]
    $region5: #{tpu_custom_call.1} parent=1 // pred_fallthru
      _
    // Predicated region
    $region6: #{tpu_custom_call.1} parent=1 // pred_check
      _
    $region7: #{tpu_custom_call.1} parent=1 // pred_check_branch
      %21 = sbr.rel (0) target = $region9
    $region8: #{tpu_custom_call.1} parent=1 // pred_region
      %s23 = ssub.s32 128, 128
      %24 = vsyncadd [#allocation6], %s23
      %s26 = sshll.u32 [#allocation5], 4
      %s27 = int_to_ptr.vmem [resolvable:$true] %s26
      %29 = dma.hbm_to_vmem [thread:$0]  %s1, 128, %s27, [#allocation6]
    $region9: #{tpu_custom_call.1} parent=1 // pred_fallthru
      _
    // Predicated region
    $region10: #{tpu_custom_call.1} parent=1 // pred_check
      _
    $region11: #{tpu_custom_call.1} parent=1 // pred_check_branch
      %31 = sbr.rel (0) target = $region13
    $region12: #{tpu_custom_call.1} parent=1 // pred_region
      %32 = dma.done [#allocation3], 256
    $region13: #{tpu_custom_call.1} parent=1 // pred_fallthru
      _
    // Predicated region
    $region14: #{tpu_custom_call.1} parent=1 // pred_check
      _
    $region15: #{tpu_custom_call.1} parent=1 // pred_check_branch
      %34 = sbr.rel (0) target = $region17
    $region16: #{tpu_custom_call.1} parent=1 // pred_region
      %35 = dma.done [#allocation6], 128
    $region17: #{tpu_custom_call.1} parent=1 // pred_fallthru
      _
    %s36 = smul.u32 0, 1024
    %v37 = vlaneseq
    %v38 = vshrl.u32 %v37, 7
    %v39 = vadd.s32 %v38, 8
    %v40 = vadd.s32 %v38, 16
    %v41 = vadd.s32 %v38, 24
    %v42 = vadd.s32 %v38, 32
    %v43 = vadd.s32 %v38, 40
    %v44 = vadd.s32 %v38, 48
    %v45 = vadd.s32 %v38, 56
    %v46 = vadd.s32 %v38, 64
    %v47 = vadd.s32 %v38, 72
    %v48 = vadd.s32 %v38, 80
    %v49 = vadd.s32 %v38, 88
    %v50 = vadd.s32 %v38, 96
    %v51 = vadd.s32 %v38, 104
    %v52 = vadd.s32 %v38, 112
    %v53 = vadd.s32 %v38, 120
    %v54 = vadd.s32 %v38, 128
    %v55 = vadd.s32 %v38, 136
    %v56 = vadd.s32 %v38, 144
    %v57 = vadd.s32 %v38, 152
    %v58 = vadd.s32 %v38, 160
    %v59 = vadd.s32 %v38, 168
    %v60 = vadd.s32 %v38, 176
    %v61 = vadd.s32 %v38, 184
    %v62 = vadd.s32 %v38, 192
    %v63 = vadd.s32 %v38, 200
    %v64 = vadd.s32 %v38, 208
    %v65 = vadd.s32 %v38, 216
    %v66 = vadd.s32 %v38, 224
    %v67 = vadd.s32 %v38, 232
    %v68 = vadd.s32 %v38, 240
    %v69 = vadd.s32 %v38, 248
    %v70 = vlaneseq
    %v71 = vand.u32 %v70, 127
    %v72 = vmul.u32 %v71, 2
    %v73 = vadd.s32 %v72, 1
    %vm74 = vcmp.eq.s32.totalorder %v38, %v73
    %vm75 = vcmp.eq.s32.totalorder %v39, %v73
    %vm76 = vcmp.eq.s32.totalorder %v40, %v73
    %vm77 = vcmp.eq.s32.totalorder %v41, %v73
    %vm78 = vcmp.eq.s32.totalorder %v42, %v73
    %vm79 = vcmp.eq.s32.totalorder %v43, %v73
    %vm80 = vcmp.eq.s32.totalorder %v44, %v73
    %vm81 = vcmp.eq.s32.totalorder %v45, %v73
    %vm82 = vcmp.eq.s32.totalorder %v46, %v73
    %vm83 = vcmp.eq.s32.totalorder %v47, %v73
    %vm84 = vcmp.eq.s32.totalorder %v48, %v73
    %vm85 = vcmp.eq.s32.totalorder %v49, %v73
    %vm86 = vcmp.eq.s32.totalorder %v50, %v73
    %vm87 = vcmp.eq.s32.totalorder %v51, %v73
    %vm88 = vcmp.eq.s32.totalorder %v52, %v73
    %vm89 = vcmp.eq.s32.totalorder %v53, %v73
    %vm90 = vcmp.eq.s32.totalorder %v54, %v73
    %vm91 = vcmp.eq.s32.totalorder %v55, %v73
    %vm92 = vcmp.eq.s32.totalorder %v56, %v73
    %vm93 = vcmp.eq.s32.totalorder %v57, %v73
    %vm94 = vcmp.eq.s32.totalorder %v58, %v73
    %vm95 = vcmp.eq.s32.totalorder %v59, %v73
    %vm96 = vcmp.eq.s32.totalorder %v60, %v73
    %vm97 = vcmp.eq.s32.totalorder %v61, %v73
    %vm98 = vcmp.eq.s32.totalorder %v62, %v73
    %vm99 = vcmp.eq.s32.totalorder %v63, %v73
    %vm100 = vcmp.eq.s32.totalorder %v64, %v73
    %vm101 = vcmp.eq.s32.totalorder %v65, %v73
    %vm102 = vcmp.eq.s32.totalorder %v66, %v73
    %vm103 = vcmp.eq.s32.totalorder %v67, %v73
    %vm104 = vcmp.eq.s32.totalorder %v68, %v73
    %vm105 = vcmp.eq.s32.totalorder %v69, %v73
    %v106 = vsel %vm74, 1.0, 0.0
    %v107 = vsel %vm75, 1.0, 0.0
    %v108 = vsel %vm76, 1.0, 0.0
    %v109 = vsel %vm77, 1.0, 0.0
    %v110 = vsel %vm78, 1.0, 0.0
    %v111 = vsel %vm79, 1.0, 0.0
    %v112 = vsel %vm80, 1.0, 0.0
    %v113 = vsel %vm81, 1.0, 0.0
    %v114 = vsel %vm82, 1.0, 0.0
    %v115 = vsel %vm83, 1.0, 0.0
    %v116 = vsel %vm84, 1.0, 0.0
    %v117 = vsel %vm85, 1.0, 0.0
    %v118 = vsel %vm86, 1.0, 0.0
    %v119 = vsel %vm87, 1.0, 0.0
    %v120 = vsel %vm88, 1.0, 0.0
    %v121 = vsel %vm89, 1.0, 0.0
    %v122 = vsel %vm90, 1.0, 0.0
    %v123 = vsel %vm91, 1.0, 0.0
    %v124 = vsel %vm92, 1.0, 0.0
    %v125 = vsel %vm93, 1.0, 0.0
    %v126 = vsel %vm94, 1.0, 0.0
    %v127 = vsel %vm95, 1.0, 0.0
    %v128 = vsel %vm96, 1.0, 0.0
    %v129 = vsel %vm97, 1.0, 0.0
    %v130 = vsel %vm98, 1.0, 0.0
    %v131 = vsel %vm99, 1.0, 0.0
    %v132 = vsel %vm100, 1.0, 0.0
    %v133 = vsel %vm101, 1.0, 0.0
    %v134 = vsel %vm102, 1.0, 0.0
    %v135 = vsel %vm103, 1.0, 0.0
    %v136 = vsel %vm104, 1.0, 0.0
    %v137 = vsel %vm105, 1.0, 0.0
    %vm138 = vcmp.eq.s32.totalorder %v38, %v72
    %vm139 = vcmp.eq.s32.totalorder %v39, %v72
    %vm140 = vcmp.eq.s32.totalorder %v40, %v72
    %vm141 = vcmp.eq.s32.totalorder %v41, %v72
    %vm142 = vcmp.eq.s32.totalorder %v42, %v72
    %vm143 = vcmp.eq.s32.totalorder %v43, %v72
    %vm144 = vcmp.eq.s32.totalorder %v44, %v72
    %vm145 = vcmp.eq.s32.totalorder %v45, %v72
    %vm146 = vcmp.eq.s32.totalorder %v46, %v72
    %vm147 = vcmp.eq.s32.totalorder %v47, %v72
    %vm148 = vcmp.eq.s32.totalorder %v48, %v72
    %vm149 = vcmp.eq.s32.totalorder %v49, %v72
    %vm150 = vcmp.eq.s32.totalorder %v50, %v72
    %vm151 = vcmp.eq.s32.totalorder %v51, %v72
    %vm152 = vcmp.eq.s32.totalorder %v52, %v72
    %vm153 = vcmp.eq.s32.totalorder %v53, %v72
    %vm154 = vcmp.eq.s32.totalorder %v54, %v72
    %vm155 = vcmp.eq.s32.totalorder %v55, %v72
    %vm156 = vcmp.eq.s32.totalorder %v56, %v72
    %vm157 = vcmp.eq.s32.totalorder %v57, %v72
    %vm158 = vcmp.eq.s32.totalorder %v58, %v72
    %vm159 = vcmp.eq.s32.totalorder %v59, %v72
    %vm160 = vcmp.eq.s32.totalorder %v60, %v72
    %vm161 = vcmp.eq.s32.totalorder %v61, %v72
    %vm162 = vcmp.eq.s32.totalorder %v62, %v72
    %vm163 = vcmp.eq.s32.totalorder %v63, %v72
    %vm164 = vcmp.eq.s32.totalorder %v64, %v72
    %vm165 = vcmp.eq.s32.totalorder %v65, %v72
    %vm166 = vcmp.eq.s32.totalorder %v66, %v72
    %vm167 = vcmp.eq.s32.totalorder %v67, %v72
    %vm168 = vcmp.eq.s32.totalorder %v68, %v72
    %vm169 = vcmp.eq.s32.totalorder %v69, %v72
    %v170 = vsel %vm138, 1.0, 0.0
    %v171 = vsel %vm139, 1.0, 0.0
    %v172 = vsel %vm140, 1.0, 0.0
    %v173 = vsel %vm141, 1.0, 0.0
    %v174 = vsel %vm142, 1.0, 0.0
    %v175 = vsel %vm143, 1.0, 0.0
    %v176 = vsel %vm144, 1.0, 0.0
    %v177 = vsel %vm145, 1.0, 0.0
    %v178 = vsel %vm146, 1.0, 0.0
    %v179 = vsel %vm147, 1.0, 0.0
    %v180 = vsel %vm148, 1.0, 0.0
    %v181 = vsel %vm149, 1.0, 0.0
    %v182 = vsel %vm150, 1.0, 0.0
    %v183 = vsel %vm151, 1.0, 0.0
    %v184 = vsel %vm152, 1.0, 0.0
    %v185 = vsel %vm153, 1.0, 0.0
    %v186 = vsel %vm154, 1.0, 0.0
    %v187 = vsel %vm155, 1.0, 0.0
    %v188 = vsel %vm156, 1.0, 0.0
    %v189 = vsel %vm157, 1.0, 0.0
    %v190 = vsel %vm158, 1.0, 0.0
    %v191 = vsel %vm159, 1.0, 0.0
    %v192 = vsel %vm160, 1.0, 0.0
    %v193 = vsel %vm161, 1.0, 0.0
    %v194 = vsel %vm162, 1.0, 0.0
    %v195 = vsel %vm163, 1.0, 0.0
    %v196 = vsel %vm164, 1.0, 0.0
    %v197 = vsel %vm165, 1.0, 0.0
    %v198 = vsel %vm166, 1.0, 0.0
    %v199 = vsel %vm167, 1.0, 0.0
    %v200 = vsel %vm168, 1.0, 0.0
    %v201 = vsel %vm169, 1.0, 0.0
    %v202 = vsub.f32 %v106, %v170
    %v203 = vsub.f32 %v107, %v171
    %v204 = vsub.f32 %v108, %v172
    %v205 = vsub.f32 %v109, %v173
    %v206 = vsub.f32 %v110, %v174
    %v207 = vsub.f32 %v111, %v175
    %v208 = vsub.f32 %v112, %v176
    %v209 = vsub.f32 %v113, %v177
    %v210 = vsub.f32 %v114, %v178
    %v211 = vsub.f32 %v115, %v179
    %v212 = vsub.f32 %v116, %v180
    %v213 = vsub.f32 %v117, %v181
    %v214 = vsub.f32 %v118, %v182
    %v215 = vsub.f32 %v119, %v183
    %v216 = vsub.f32 %v120, %v184
    %v217 = vsub.f32 %v121, %v185
    %v218 = vsub.f32 %v122, %v186
    %v219 = vsub.f32 %v123, %v187
    %v220 = vsub.f32 %v124, %v188
    %v221 = vsub.f32 %v125, %v189
    %v222 = vsub.f32 %v126, %v190
    %v223 = vsub.f32 %v127, %v191
    %v224 = vsub.f32 %v128, %v192
    %v225 = vsub.f32 %v129, %v193
    %v226 = vsub.f32 %v130, %v194
    %v227 = vsub.f32 %v131, %v195
    %v228 = vsub.f32 %v132, %v196
    %v229 = vsub.f32 %v133, %v197
    %v230 = vsub.f32 %v134, %v198
    %v231 = vsub.f32 %v135, %v199
    %v232 = vsub.f32 %v136, %v200
    %v233 = vsub.f32 %v137, %v201
    %v234 = vld [vmem:[#allocation2] sm:$0xff]
    %v235 = vld [vmem:[#allocation2 + $0x8] sm:$0xff]
    %v236 = vld [vmem:[#allocation5] sm:$0xff]
    %237 = vmatprep.subr.mxu0 0.0
    %v238 = vand.u32 %v202, 4294901760
    %239 = vmatpush1.msra.mxu0 %v238
    %240 = vmatprep.subr.mxu0 0.0
    %v241 = vand.u32 %v203, 4294901760
    %242 = vmatpush1.msra.mxu0 %v241
    %243 = vmatprep.subr.mxu0 0.0
    %v244 = vand.u32 %v204, 4294901760
    %245 = vmatpush1.msra.mxu0 %v244
    %246 = vmatprep.subr.mxu0 0.0
    %v247 = vand.u32 %v205, 4294901760
    %248 = vmatpush1.msra.mxu0 %v247
    %249 = vmatprep.subr.mxu0 0.0
    %v250 = vand.u32 %v206, 4294901760
    %251 = vmatpush1.msra.mxu0 %v250
    %252 = vmatprep.subr.mxu0 0.0
    %v253 = vand.u32 %v207, 4294901760
    %254 = vmatpush1.msra.mxu0 %v253
    %255 = vmatprep.subr.mxu0 0.0
    %v256 = vand.u32 %v208, 4294901760
    %257 = vmatpush1.msra.mxu0 %v256
    %258 = vmatprep.subr.mxu0 0.0
    %v259 = vand.u32 %v209, 4294901760
    %260 = vmatpush1.msra.mxu0 %v259
    %261 = vmatprep.subr.mxu0 0.0
    %v262 = vand.u32 %v210, 4294901760
    %263 = vmatpush1.msra.mxu0 %v262
    %264 = vmatprep.subr.mxu0 0.0
    %v265 = vand.u32 %v211, 4294901760
    %266 = vmatpush1.msra.mxu0 %v265
    %267 = vmatprep.subr.mxu0 0.0
    %v268 = vand.u32 %v212, 4294901760
    %269 = vmatpush1.msra.mxu0 %v268
    %270 = vmatprep.subr.mxu0 0.0
    %v271 = vand.u32 %v213, 4294901760
    %272 = vmatpush1.msra.mxu0 %v271
    %273 = vmatprep.subr.mxu0 0.0
    %v274 = vand.u32 %v214, 4294901760
    %275 = vmatpush1.msra.mxu0 %v274
    %276 = vmatprep.subr.mxu0 0.0
    %v277 = vand.u32 %v215, 4294901760
    %278 = vmatpush1.msra.mxu0 %v277
    %279 = vmatprep.subr.mxu0 0.0
    %v280 = vand.u32 %v216, 4294901760
    %281 = vmatpush1.msra.mxu0 %v280
    %282 = vmatprep.subr.mxu0 0.0
    %v283 = vand.u32 %v217, 4294901760
    %284 = vmatpush1.msra.mxu0 %v283
    %285 = vmatprep.subr.mxu0 0.0
    %v286 = vand.u32 %v218, 4294901760
    %287 = vmatpush1.msra.mxu0 %v286
    %288 = vmatprep.subr.mxu0 0.0
    %v289 = vand.u32 %v219, 4294901760
    %290 = vmatpush1.msra.mxu0 %v289
    %291 = vmatprep.subr.mxu0 0.0
    %v292 = vand.u32 %v220, 4294901760
    %293 = vmatpush1.msra.mxu0 %v292
    %294 = vmatprep.subr.mxu0 0.0
    %v295 = vand.u32 %v221, 4294901760
    %296 = vmatpush1.msra.mxu0 %v295
    %297 = vmatprep.subr.mxu0 0.0
    %v298 = vand.u32 %v222, 4294901760
    %299 = vmatpush1.msra.mxu0 %v298
    %300 = vmatprep.subr.mxu0 0.0
    %v301 = vand.u32 %v223, 4294901760
    %302 = vmatpush1.msra.mxu0 %v301
    %303 = vmatprep.subr.mxu0 0.0
    %v304 = vand.u32 %v224, 4294901760
    %305 = vmatpush1.msra.mxu0 %v304
    %306 = vmatprep.subr.mxu0 0.0
    %v307 = vand.u32 %v225, 4294901760
    %308 = vmatpush1.msra.mxu0 %v307
    %309 = vmatprep.subr.mxu0 0.0
    %v310 = vand.u32 %v226, 4294901760
    %311 = vmatpush1.msra.mxu0 %v310
    %312 = vmatprep.subr.mxu0 0.0
    %v313 = vand.u32 %v227, 4294901760
    %314 = vmatpush1.msra.mxu0 %v313
    %315 = vmatprep.subr.mxu0 0.0
    %v316 = vand.u32 %v228, 4294901760
    %317 = vmatpush1.msra.mxu0 %v316
    %318 = vmatprep.subr.mxu0 0.0
    %v319 = vand.u32 %v229, 4294901760
    %320 = vmatpush1.msra.mxu0 %v319
    %321 = vmatprep.subr.mxu0 0.0
    %v322 = vand.u32 %v230, 4294901760
    %323 = vmatpush1.msra.mxu0 %v322
    %324 = vmatprep.subr.mxu0 0.0
    %v325 = vand.u32 %v231, 4294901760
    %326 = vmatpush1.msra.mxu0 %v325
    %327 = vmatprep.subr.mxu0 0.0
    %v328 = vand.u32 %v232, 4294901760
    %329 = vmatpush1.msra.mxu0 %v328
    %330 = vmatprep.subr.mxu0 0.0
    %v331 = vand.u32 %v233, 4294901760
    %332 = vmatpush1.msra.mxu0 %v331
    %v333 = vand.u32 %v235, 4294901760
    %v334 = vsub.f32 %v235, %v333
    %v335 = vand.u32 %v334, 4294901760
    %v336 = vsub.f32 %v334, %v335
    %v337 = vand.u32 %v336, 4294901760
    %338 = vmatprep.mubr.f32.mxu0 %v337
    %v339 = vand.u32 %v234, 4294901760
    %v340 = vsub.f32 %v234, %v339
    %v341 = vand.u32 %v340, 4294901760
    %v342 = vsub.f32 %v340, %v341
    %v343 = vand.u32 %v342, 4294901760
    %344 = vmatmul.mubr.f32.gmra.mrb[0].mxu0 %v343
    %v345 = vpop.f32.mrb[0].mxu0
    %v346 = vadd.f32 0.0, %v345
    %v347 = vpop.f32.mrb[0].mxu0
    %348 = vdwg.mxu0
    %349 = vmatprep.subr.mxu0 0.0
    %v350 = vand.u32 %v202, 4294901760
    %v351 = vsub.f32 %v202, %v350
    %v352 = vand.u32 %v351, 4294901760
    %v353 = vsub.f32 %v351, %v352
    %v354 = vand.u32 %v353, 4294901760
    %355 = vmatpush1.msra.mxu0 %v354
    %356 = vmatprep.subr.mxu0 0.0
    %v357 = vand.u32 %v203, 4294901760
    %v358 = vsub.f32 %v203, %v357
    %v359 = vand.u32 %v358, 4294901760
    %v360 = vsub.f32 %v358, %v359
    %v361 = vand.u32 %v360, 4294901760
    %362 = vmatpush1.msra.mxu0 %v361
    %363 = vmatprep.subr.mxu0 0.0
    %v364 = vand.u32 %v204, 4294901760
    %v365 = vsub.f32 %v204, %v364
    %v366 = vand.u32 %v365, 4294901760
    %v367 = vsub.f32 %v365, %v366
    %v368 = vand.u32 %v367, 4294901760
    %369 = vmatpush1.msra.mxu0 %v368
    %370 = vmatprep.subr.mxu0 0.0
    %v371 = vand.u32 %v205, 4294901760
    %v372 = vsub.f32 %v205, %v371
    %v373 = vand.u32 %v372, 4294901760
    %v374 = vsub.f32 %v372, %v373
    %v375 = vand.u32 %v374, 4294901760
    %376 = vmatpush1.msra.mxu0 %v375
    %377 = vmatprep.subr.mxu0 0.0
    %v378 = vand.u32 %v206, 4294901760
    %v379 = vsub.f32 %v206, %v378
    %v380 = vand.u32 %v379, 4294901760
    %v381 = vsub.f32 %v379, %v380
    %v382 = vand.u32 %v381, 4294901760
    %383 = vmatpush1.msra.mxu0 %v382
    %384 = vmatprep.subr.mxu0 0.0
    %v385 = vand.u32 %v207, 4294901760
    %v386 = vsub.f32 %v207, %v385
    %v387 = vand.u32 %v386, 4294901760
    %v388 = vsub.f32 %v386, %v387
    %v389 = vand.u32 %v388, 4294901760
    %390 = vmatpush1.msra.mxu0 %v389
    %391 = vmatprep.subr.mxu0 0.0
    %v392 = vand.u32 %v208, 4294901760
    %v393 = vsub.f32 %v208, %v392
    %v394 = vand.u32 %v393, 4294901760
    %v395 = vsub.f32 %v393, %v394
    %v396 = vand.u32 %v395, 4294901760
    %397 = vmatpush1.msra.mxu0 %v396
    %398 = vmatprep.subr.mxu0 0.0
    %v399 = vand.u32 %v209, 4294901760
    %v400 = vsub.f32 %v209, %v399
    %v401 = vand.u32 %v400, 4294901760
    %v402 = vsub.f32 %v400, %v401
    %v403 = vand.u32 %v402, 4294901760
    %404 = vmatpush1.msra.mxu0 %v403
    %405 = vmatprep.subr.mxu0 0.0
    %v406 = vand.u32 %v210, 4294901760
    %v407 = vsub.f32 %v210, %v406
    %v408 = vand.u32 %v407, 4294901760
    %v409 = vsub.f32 %v407, %v408
    %v410 = vand.u32 %v409, 4294901760
    %411 = vmatpush1.msra.mxu0 %v410
    %412 = vmatprep.subr.mxu0 0.0
    %v413 = vand.u32 %v211, 4294901760
    %v414 = vsub.f32 %v211, %v413
    %v415 = vand.u32 %v414, 4294901760
    %v416 = vsub.f32 %v414, %v415
    %v417 = vand.u32 %v416, 4294901760
    %418 = vmatpush1.msra.mxu0 %v417
    %419 = vmatprep.subr.mxu0 0.0
    %v420 = vand.u32 %v212, 4294901760
    %v421 = vsub.f32 %v212, %v420
    %v422 = vand.u32 %v421, 4294901760
    %v423 = vsub.f32 %v421, %v422
    %v424 = vand.u32 %v423, 4294901760
    %425 = vmatpush1.msra.mxu0 %v424
    %426 = vmatprep.subr.mxu0 0.0
    %v427 = vand.u32 %v213, 4294901760
    %v428 = vsub.f32 %v213, %v427
    %v429 = vand.u32 %v428, 4294901760
    %v430 = vsub.f32 %v428, %v429
    %v431 = vand.u32 %v430, 4294901760
    %432 = vmatpush1.msra.mxu0 %v431
    %433 = vmatprep.subr.mxu0 0.0
    %v434 = vand.u32 %v214, 4294901760
    %v435 = vsub.f32 %v214, %v434
    %v436 = vand.u32 %v435, 4294901760
    %v437 = vsub.f32 %v435, %v436
    %v438 = vand.u32 %v437, 4294901760
    %439 = vmatpush1.msra.mxu0 %v438
    %440 = vmatprep.subr.mxu0 0.0
    %v441 = vand.u32 %v215, 4294901760
    %v442 = vsub.f32 %v215, %v441
    %v443 = vand.u32 %v442, 4294901760
    %v444 = vsub.f32 %v442, %v443
    %v445 = vand.u32 %v444, 4294901760
    %446 = vmatpush1.msra.mxu0 %v445
    %447 = vmatprep.subr.mxu0 0.0
    %v448 = vand.u32 %v216, 4294901760
    %v449 = vsub.f32 %v216, %v448
    %v450 = vand.u32 %v449, 4294901760
    %v451 = vsub.f32 %v449, %v450
    %v452 = vand.u32 %v451, 4294901760
    %453 = vmatpush1.msra.mxu0 %v452
    %454 = vmatprep.subr.mxu0 0.0
    %v455 = vand.u32 %v217, 4294901760
    %v456 = vsub.f32 %v217, %v455
    %v457 = vand.u32 %v456, 4294901760
    %v458 = vsub.f32 %v456, %v457
    %v459 = vand.u32 %v458, 4294901760
    %460 = vmatpush1.msra.mxu0 %v459
    %461 = vmatprep.subr.mxu0 0.0
    %v462 = vand.u32 %v218, 4294901760
    %v463 = vsub.f32 %v218, %v462
    %v464 = vand.u32 %v463, 4294901760
    %v465 = vsub.f32 %v463, %v464
    %v466 = vand.u32 %v465, 4294901760
    %467 = vmatpush1.msra.mxu0 %v466
    %468 = vmatprep.subr.mxu0 0.0
    %v469 = vand.u32 %v219, 4294901760
    %v470 = vsub.f32 %v219, %v469
    %v471 = vand.u32 %v470, 4294901760
    %v472 = vsub.f32 %v470, %v471
    %v473 = vand.u32 %v472, 4294901760
    %474 = vmatpush1.msra.mxu0 %v473
    %475 = vmatprep.subr.mxu0 0.0
    %v476 = vand.u32 %v220, 4294901760
    %v477 = vsub.f32 %v220, %v476
    %v478 = vand.u32 %v477, 4294901760
    %v479 = vsub.f32 %v477, %v478
    %v480 = vand.u32 %v479, 4294901760
    %481 = vmatpush1.msra.mxu0 %v480
    %482 = vmatprep.subr.mxu0 0.0
    %v483 = vand.u32 %v221, 4294901760
    %v484 = vsub.f32 %v221, %v483
    %v485 = vand.u32 %v484, 4294901760
    %v486 = vsub.f32 %v484, %v485
    %v487 = vand.u32 %v486, 4294901760
    %488 = vmatpush1.msra.mxu0 %v487
    %489 = vmatprep.subr.mxu0 0.0
    %v490 = vand.u32 %v222, 4294901760
    %v491 = vsub.f32 %v222, %v490
    %v492 = vand.u32 %v491, 4294901760
    %v493 = vsub.f32 %v491, %v492
    %v494 = vand.u32 %v493, 4294901760
    %495 = vmatpush1.msra.mxu0 %v494
    %496 = vmatprep.subr.mxu0 0.0
    %v497 = vand.u32 %v223, 4294901760
    %v498 = vsub.f32 %v223, %v497
    %v499 = vand.u32 %v498, 4294901760
    %v500 = vsub.f32 %v498, %v499
    %v501 = vand.u32 %v500, 4294901760
    %502 = vmatpush1.msra.mxu0 %v501
    %503 = vmatprep.subr.mxu0 0.0
    %v504 = vand.u32 %v224, 4294901760
    %v505 = vsub.f32 %v224, %v504
    %v506 = vand.u32 %v505, 4294901760
    %v507 = vsub.f32 %v505, %v506
    %v508 = vand.u32 %v507, 4294901760
    %509 = vmatpush1.msra.mxu0 %v508
    %510 = vmatprep.subr.mxu0 0.0
    %v511 = vand.u32 %v225, 4294901760
    %v512 = vsub.f32 %v225, %v511
    %v513 = vand.u32 %v512, 4294901760
    %v514 = vsub.f32 %v512, %v513
    %v515 = vand.u32 %v514, 4294901760
    %516 = vmatpush1.msra.mxu0 %v515
    %517 = vmatprep.subr.mxu0 0.0
    %v518 = vand.u32 %v226, 4294901760
    %v519 = vsub.f32 %v226, %v518
    %v520 = vand.u32 %v519, 4294901760
    %v521 = vsub.f32 %v519, %v520
    %v522 = vand.u32 %v521, 4294901760
    %523 = vmatpush1.msra.mxu0 %v522
    %524 = vmatprep.subr.mxu0 0.0
    %v525 = vand.u32 %v227, 4294901760
    %v526 = vsub.f32 %v227, %v525
    %v527 = vand.u32 %v526, 4294901760
    %v528 = vsub.f32 %v526, %v527
    %v529 = vand.u32 %v528, 4294901760
    %530 = vmatpush1.msra.mxu0 %v529
    %531 = vmatprep.subr.mxu0 0.0
    %v532 = vand.u32 %v228, 4294901760
    %v533 = vsub.f32 %v228, %v532
    %v534 = vand.u32 %v533, 4294901760
    %v535 = vsub.f32 %v533, %v534
    %v536 = vand.u32 %v535, 4294901760
    %537 = vmatpush1.msra.mxu0 %v536
    %538 = vmatprep.subr.mxu0 0.0
    %v539 = vand.u32 %v229, 4294901760
    %v540 = vsub.f32 %v229, %v539
    %v541 = vand.u32 %v540, 4294901760
    %v542 = vsub.f32 %v540, %v541
    %v543 = vand.u32 %v542, 4294901760
    %544 = vmatpush1.msra.mxu0 %v543
    %545 = vmatprep.subr.mxu0 0.0
    %v546 = vand.u32 %v230, 4294901760
    %v547 = vsub.f32 %v230, %v546
    %v548 = vand.u32 %v547, 4294901760
    %v549 = vsub.f32 %v547, %v548
    %v550 = vand.u32 %v549, 4294901760
    %551 = vmatpush1.msra.mxu0 %v550
    %552 = vmatprep.subr.mxu0 0.0
    %v553 = vand.u32 %v231, 4294901760
    %v554 = vsub.f32 %v231, %v553
    %v555 = vand.u32 %v554, 4294901760
    %v556 = vsub.f32 %v554, %v555
    %v557 = vand.u32 %v556, 4294901760
    %558 = vmatpush1.msra.mxu0 %v557
    %559 = vmatprep.subr.mxu0 0.0
    %v560 = vand.u32 %v232, 4294901760
    %v561 = vsub.f32 %v232, %v560
    %v562 = vand.u32 %v561, 4294901760
    %v563 = vsub.f32 %v561, %v562
    %v564 = vand.u32 %v563, 4294901760
    %565 = vmatpush1.msra.mxu0 %v564
    %566 = vmatprep.subr.mxu0 0.0
    %v567 = vand.u32 %v233, 4294901760
    %v568 = vsub.f32 %v233, %v567
    %v569 = vand.u32 %v568, 4294901760
    %v570 = vsub.f32 %v568, %v569
    %v571 = vand.u32 %v570, 4294901760
    %572 = vmatpush1.msra.mxu0 %v571
    %v573 = vand.u32 %v235, 4294901760
    %574 = vmatprep.mubr.f32.mxu0 %v573
    %v575 = vand.u32 %v234, 4294901760
    %576 = vmatmul.mubr.f32.gmra.mrb[0].mxu0 %v575
    %v577 = vpop.f32.mrb[0].mxu0
    %v578 = vadd.f32 %v346, %v577
    %v579 = vpop.f32.mrb[0].mxu0
    %580 = vdwg.mxu0
    %581 = vmatprep.subr.mxu0 0.0
    %v582 = vand.u32 %v202, 4294901760
    %v583 = vsub.f32 %v202, %v582
    %584 = vmatpush1.msra.mxu0 %v583
    %585 = vmatprep.subr.mxu0 0.0
    %v586 = vand.u32 %v203, 4294901760
    %v587 = vsub.f32 %v203, %v586
    %588 = vmatpush1.msra.mxu0 %v587
    %589 = vmatprep.subr.mxu0 0.0
    %v590 = vand.u32 %v204, 4294901760
    %v591 = vsub.f32 %v204, %v590
    %592 = vmatpush1.msra.mxu0 %v591
    %593 = vmatprep.subr.mxu0 0.0
    %v594 = vand.u32 %v205, 4294901760
    %v595 = vsub.f32 %v205, %v594
    %596 = vmatpush1.msra.mxu0 %v595
    %597 = vmatprep.subr.mxu0 0.0
    %v598 = vand.u32 %v206, 4294901760
    %v599 = vsub.f32 %v206, %v598
    %600 = vmatpush1.msra.mxu0 %v599
    %601 = vmatprep.subr.mxu0 0.0
    %v602 = vand.u32 %v207, 4294901760
    %v603 = vsub.f32 %v207, %v602
    %604 = vmatpush1.msra.mxu0 %v603
    %605 = vmatprep.subr.mxu0 0.0
    %v606 = vand.u32 %v208, 4294901760
    %v607 = vsub.f32 %v208, %v606
    %608 = vmatpush1.msra.mxu0 %v607
    %609 = vmatprep.subr.mxu0 0.0
    %v610 = vand.u32 %v209, 4294901760
    %v611 = vsub.f32 %v209, %v610
    %612 = vmatpush1.msra.mxu0 %v611
    %613 = vmatprep.subr.mxu0 0.0
    %v614 = vand.u32 %v210, 4294901760
    %v615 = vsub.f32 %v210, %v614
    %616 = vmatpush1.msra.mxu0 %v615
    %617 = vmatprep.subr.mxu0 0.0
    %v618 = vand.u32 %v211, 4294901760
    %v619 = vsub.f32 %v211, %v618
    %620 = vmatpush1.msra.mxu0 %v619
    %621 = vmatprep.subr.mxu0 0.0
    %v622 = vand.u32 %v212, 4294901760
    %v623 = vsub.f32 %v212, %v622
    %624 = vmatpush1.msra.mxu0 %v623
    %625 = vmatprep.subr.mxu0 0.0
    %v626 = vand.u32 %v213, 4294901760
    %v627 = vsub.f32 %v213, %v626
    %628 = vmatpush1.msra.mxu0 %v627
    %629 = vmatprep.subr.mxu0 0.0
    %v630 = vand.u32 %v214, 4294901760
    %v631 = vsub.f32 %v214, %v630
    %632 = vmatpush1.msra.mxu0 %v631
    %633 = vmatprep.subr.mxu0 0.0
    %v634 = vand.u32 %v215, 4294901760
    %v635 = vsub.f32 %v215, %v634
    %636 = vmatpush1.msra.mxu0 %v635
    %637 = vmatprep.subr.mxu0 0.0
    %v638 = vand.u32 %v216, 4294901760
    %v639 = vsub.f32 %v216, %v638
    %640 = vmatpush1.msra.mxu0 %v639
    %641 = vmatprep.subr.mxu0 0.0
    %v642 = vand.u32 %v217, 4294901760
    %v643 = vsub.f32 %v217, %v642
    %644 = vmatpush1.msra.mxu0 %v643
    %645 = vmatprep.subr.mxu0 0.0
    %v646 = vand.u32 %v218, 4294901760
    %v647 = vsub.f32 %v218, %v646
    %648 = vmatpush1.msra.mxu0 %v647
    %649 = vmatprep.subr.mxu0 0.0
    %v650 = vand.u32 %v219, 4294901760
    %v651 = vsub.f32 %v219, %v650
    %652 = vmatpush1.msra.mxu0 %v651
    %653 = vmatprep.subr.mxu0 0.0
    %v654 = vand.u32 %v220, 4294901760
    %v655 = vsub.f32 %v220, %v654
    %656 = vmatpush1.msra.mxu0 %v655
    %657 = vmatprep.subr.mxu0 0.0
    %v658 = vand.u32 %v221, 4294901760
    %v659 = vsub.f32 %v221, %v658
    %660 = vmatpush1.msra.mxu0 %v659
    %661 = vmatprep.subr.mxu0 0.0
    %v662 = vand.u32 %v222, 4294901760
    %v663 = vsub.f32 %v222, %v662
    %664 = vmatpush1.msra.mxu0 %v663
    %665 = vmatprep.subr.mxu0 0.0
    %v666 = vand.u32 %v223, 4294901760
    %v667 = vsub.f32 %v223, %v666
    %668 = vmatpush1.msra.mxu0 %v667
    %669 = vmatprep.subr.mxu0 0.0
    %v670 = vand.u32 %v224, 4294901760
    %v671 = vsub.f32 %v224, %v670
    %672 = vmatpush1.msra.mxu0 %v671
    %673 = vmatprep.subr.mxu0 0.0
    %v674 = vand.u32 %v225, 4294901760
    %v675 = vsub.f32 %v225, %v674
    %676 = vmatpush1.msra.mxu0 %v675
    %677 = vmatprep.subr.mxu0 0.0
    %v678 = vand.u32 %v226, 4294901760
    %v679 = vsub.f32 %v226, %v678
    %680 = vmatpush1.msra.mxu0 %v679
    %681 = vmatprep.subr.mxu0 0.0
    %v682 = vand.u32 %v227, 4294901760
    %v683 = vsub.f32 %v227, %v682
    %684 = vmatpush1.msra.mxu0 %v683
    %685 = vmatprep.subr.mxu0 0.0
    %v686 = vand.u32 %v228, 4294901760
    %v687 = vsub.f32 %v228, %v686
    %688 = vmatpush1.msra.mxu0 %v687
    %689 = vmatprep.subr.mxu0 0.0
    %v690 = vand.u32 %v229, 4294901760
    %v691 = vsub.f32 %v229, %v690
    %692 = vmatpush1.msra.mxu0 %v691
    %693 = vmatprep.subr.mxu0 0.0
    %v694 = vand.u32 %v230, 4294901760
    %v695 = vsub.f32 %v230, %v694
    %696 = vmatpush1.msra.mxu0 %v695
    %697 = vmatprep.subr.mxu0 0.0
    %v698 = vand.u32 %v231, 4294901760
    %v699 = vsub.f32 %v231, %v698
    %700 = vmatpush1.msra.mxu0 %v699
    %701 = vmatprep.subr.mxu0 0.0
    %v702 = vand.u32 %v232, 4294901760
    %v703 = vsub.f32 %v232, %v702
    %704 = vmatpush1.msra.mxu0 %v703
    %705 = vmatprep.subr.mxu0 0.0
    %v706 = vand.u32 %v233, 4294901760
    %v707 = vsub.f32 %v233, %v706
    %708 = vmatpush1.msra.mxu0 %v707
    %v709 = vand.u32 %v235, 4294901760
    %v710 = vsub.f32 %v235, %v709
    %711 = vmatprep.mubr.f32.mxu0 %v710
    %v712 = vand.u32 %v234, 4294901760
    %v713 = vsub.f32 %v234, %v712
    %714 = vmatmul.mubr.f32.gmra.mrb[0].mxu0 %v713
    %v715 = vpop.f32.mrb[0].mxu0
    %v716 = vadd.f32 %v578, %v715
    %v717 = vpop.f32.mrb[0].mxu0
    %718 = vdwg.mxu0
    %719 = vmatprep.subr.mxu0 0.0
    %v720 = vand.u32 %v202, 4294901760
    %721 = vmatpush1.msra.mxu0 %v720
    %722 = vmatprep.subr.mxu0 0.0
    %v723 = vand.u32 %v203, 4294901760
    %724 = vmatpush1.msra.mxu0 %v723
    %725 = vmatprep.subr.mxu0 0.0
    %v726 = vand.u32 %v204, 4294901760
    %727 = vmatpush1.msra.mxu0 %v726
    %728 = vmatprep.subr.mxu0 0.0
    %v729 = vand.u32 %v205, 4294901760
    %730 = vmatpush1.msra.mxu0 %v729
    %731 = vmatprep.subr.mxu0 0.0
    %v732 = vand.u32 %v206, 4294901760
    %733 = vmatpush1.msra.mxu0 %v732
    %734 = vmatprep.subr.mxu0 0.0
    %v735 = vand.u32 %v207, 4294901760
    %736 = vmatpush1.msra.mxu0 %v735
    %737 = vmatprep.subr.mxu0 0.0
    %v738 = vand.u32 %v208, 4294901760
    %739 = vmatpush1.msra.mxu0 %v738
    %740 = vmatprep.subr.mxu0 0.0
    %v741 = vand.u32 %v209, 4294901760
    %742 = vmatpush1.msra.mxu0 %v741
    %743 = vmatprep.subr.mxu0 0.0
    %v744 = vand.u32 %v210, 4294901760
    %745 = vmatpush1.msra.mxu0 %v744
    %746 = vmatprep.subr.mxu0 0.0
    %v747 = vand.u32 %v211, 4294901760
    %748 = vmatpush1.msra.mxu0 %v747
    %749 = vmatprep.subr.mxu0 0.0
    %v750 = vand.u32 %v212, 4294901760
    %751 = vmatpush1.msra.mxu0 %v750
    %752 = vmatprep.subr.mxu0 0.0
    %v753 = vand.u32 %v213, 4294901760
    %754 = vmatpush1.msra.mxu0 %v753
    %755 = vmatprep.subr.mxu0 0.0
    %v756 = vand.u32 %v214, 4294901760
    %757 = vmatpush1.msra.mxu0 %v756
    %758 = vmatprep.subr.mxu0 0.0
    %v759 = vand.u32 %v215, 4294901760
    %760 = vmatpush1.msra.mxu0 %v759
    %761 = vmatprep.subr.mxu0 0.0
    %v762 = vand.u32 %v216, 4294901760
    %763 = vmatpush1.msra.mxu0 %v762
    %764 = vmatprep.subr.mxu0 0.0
    %v765 = vand.u32 %v217, 4294901760
    %766 = vmatpush1.msra.mxu0 %v765
    %767 = vmatprep.subr.mxu0 0.0
    %v768 = vand.u32 %v218, 4294901760
    %769 = vmatpush1.msra.mxu0 %v768
    %770 = vmatprep.subr.mxu0 0.0
    %v771 = vand.u32 %v219, 4294901760
    %772 = vmatpush1.msra.mxu0 %v771
    %773 = vmatprep.subr.mxu0 0.0
    %v774 = vand.u32 %v220, 4294901760
    %775 = vmatpush1.msra.mxu0 %v774
    %776 = vmatprep.subr.mxu0 0.0
    %v777 = vand.u32 %v221, 4294901760
    %778 = vmatpush1.msra.mxu0 %v777
    %779 = vmatprep.subr.mxu0 0.0
    %v780 = vand.u32 %v222, 4294901760
    %781 = vmatpush1.msra.mxu0 %v780
    %782 = vmatprep.subr.mxu0 0.0
    %v783 = vand.u32 %v223, 4294901760
    %784 = vmatpush1.msra.mxu0 %v783
    %785 = vmatprep.subr.mxu0 0.0
    %v786 = vand.u32 %v224, 4294901760
    %787 = vmatpush1.msra.mxu0 %v786
    %788 = vmatprep.subr.mxu0 0.0
    %v789 = vand.u32 %v225, 4294901760
    %790 = vmatpush1.msra.mxu0 %v789
    %791 = vmatprep.subr.mxu0 0.0
    %v792 = vand.u32 %v226, 4294901760
    %793 = vmatpush1.msra.mxu0 %v792
    %794 = vmatprep.subr.mxu0 0.0
    %v795 = vand.u32 %v227, 4294901760
    %796 = vmatpush1.msra.mxu0 %v795
    %797 = vmatprep.subr.mxu0 0.0
    %v798 = vand.u32 %v228, 4294901760
    %799 = vmatpush1.msra.mxu0 %v798
    %800 = vmatprep.subr.mxu0 0.0
    %v801 = vand.u32 %v229, 4294901760
    %802 = vmatpush1.msra.mxu0 %v801
    %803 = vmatprep.subr.mxu0 0.0
    %v804 = vand.u32 %v230, 4294901760
    %805 = vmatpush1.msra.mxu0 %v804
    %806 = vmatprep.subr.mxu0 0.0
    %v807 = vand.u32 %v231, 4294901760
    %808 = vmatpush1.msra.mxu0 %v807
    %809 = vmatprep.subr.mxu0 0.0
    %v810 = vand.u32 %v232, 4294901760
    %811 = vmatpush1.msra.mxu0 %v810
    %812 = vmatprep.subr.mxu0 0.0
    %v813 = vand.u32 %v233, 4294901760
    %814 = vmatpush1.msra.mxu0 %v813
    %v815 = vand.u32 %v235, 4294901760
    %v816 = vsub.f32 %v235, %v815
    %v817 = vand.u32 %v816, 4294901760
    %818 = vmatprep.mubr.f32.mxu0 %v817
    %v819 = vand.u32 %v234, 4294901760
    %v820 = vsub.f32 %v234, %v819
    %v821 = vand.u32 %v820, 4294901760
    %822 = vmatmul.mubr.f32.gmra.mrb[0].mxu0 %v821
    %v823 = vpop.f32.mrb[0].mxu0
    %v824 = vadd.f32 %v716, %v823
    %v825 = vpop.f32.mrb[0].mxu0
    %826 = vdwg.mxu0
    %827 = vmatprep.subr.mxu0 0.0
    %v828 = vand.u32 %v202, 4294901760
    %v829 = vsub.f32 %v202, %v828
    %v830 = vand.u32 %v829, 4294901760
    %831 = vmatpush1.msra.mxu0 %v830
    %832 = vmatprep.subr.mxu0 0.0
    %v833 = vand.u32 %v203, 4294901760
    %v834 = vsub.f32 %v203, %v833
    %v835 = vand.u32 %v834, 4294901760
    %836 = vmatpush1.msra.mxu0 %v835
    %837 = vmatprep.subr.mxu0 0.0
    %v838 = vand.u32 %v204, 4294901760
    %v839 = vsub.f32 %v204, %v838
    %v840 = vand.u32 %v839, 4294901760
    %841 = vmatpush1.msra.mxu0 %v840
    %842 = vmatprep.subr.mxu0 0.0
    %v843 = vand.u32 %v205, 4294901760
    %v844 = vsub.f32 %v205, %v843
    %v845 = vand.u32 %v844, 4294901760
    %846 = vmatpush1.msra.mxu0 %v845
    %847 = vmatprep.subr.mxu0 0.0
    %v848 = vand.u32 %v206, 4294901760
    %v849 = vsub.f32 %v206, %v848
    %v850 = vand.u32 %v849, 4294901760
    %851 = vmatpush1.msra.mxu0 %v850
    %852 = vmatprep.subr.mxu0 0.0
    %v853 = vand.u32 %v207, 4294901760
    %v854 = vsub.f32 %v207, %v853
    %v855 = vand.u32 %v854, 4294901760
    %856 = vmatpush1.msra.mxu0 %v855
    %857 = vmatprep.subr.mxu0 0.0
    %v858 = vand.u32 %v208, 4294901760
    %v859 = vsub.f32 %v208, %v858
    %v860 = vand.u32 %v859, 4294901760
    %861 = vmatpush1.msra.mxu0 %v860
    %862 = vmatprep.subr.mxu0 0.0
    %v863 = vand.u32 %v209, 4294901760
    %v864 = vsub.f32 %v209, %v863
    %v865 = vand.u32 %v864, 4294901760
    %866 = vmatpush1.msra.mxu0 %v865
    %867 = vmatprep.subr.mxu0 0.0
    %v868 = vand.u32 %v210, 4294901760
    %v869 = vsub.f32 %v210, %v868
    %v870 = vand.u32 %v869, 4294901760
    %871 = vmatpush1.msra.mxu0 %v870
    %872 = vmatprep.subr.mxu0 0.0
    %v873 = vand.u32 %v211, 4294901760
    %v874 = vsub.f32 %v211, %v873
    %v875 = vand.u32 %v874, 4294901760
    %876 = vmatpush1.msra.mxu0 %v875
    %877 = vmatprep.subr.mxu0 0.0
    %v878 = vand.u32 %v212, 4294901760
    %v879 = vsub.f32 %v212, %v878
    %v880 = vand.u32 %v879, 4294901760
    %881 = vmatpush1.msra.mxu0 %v880
    %882 = vmatprep.subr.mxu0 0.0
    %v883 = vand.u32 %v213, 4294901760
    %v884 = vsub.f32 %v213, %v883
    %v885 = vand.u32 %v884, 4294901760
    %886 = vmatpush1.msra.mxu0 %v885
    %887 = vmatprep.subr.mxu0 0.0
    %v888 = vand.u32 %v214, 4294901760
    %v889 = vsub.f32 %v214, %v888
    %v890 = vand.u32 %v889, 4294901760
    %891 = vmatpush1.msra.mxu0 %v890
    %892 = vmatprep.subr.mxu0 0.0
    %v893 = vand.u32 %v215, 4294901760
    %v894 = vsub.f32 %v215, %v893
    %v895 = vand.u32 %v894, 4294901760
    %896 = vmatpush1.msra.mxu0 %v895
    %897 = vmatprep.subr.mxu0 0.0
    %v898 = vand.u32 %v216, 4294901760
    %v899 = vsub.f32 %v216, %v898
    %v900 = vand.u32 %v899, 4294901760
    %901 = vmatpush1.msra.mxu0 %v900
    %902 = vmatprep.subr.mxu0 0.0
    %v903 = vand.u32 %v217, 4294901760
    %v904 = vsub.f32 %v217, %v903
    %v905 = vand.u32 %v904, 4294901760
    %906 = vmatpush1.msra.mxu0 %v905
    %907 = vmatprep.subr.mxu0 0.0
    %v908 = vand.u32 %v218, 4294901760
    %v909 = vsub.f32 %v218, %v908
    %v910 = vand.u32 %v909, 4294901760
    %911 = vmatpush1.msra.mxu0 %v910
    %912 = vmatprep.subr.mxu0 0.0
    %v913 = vand.u32 %v219, 4294901760
    %v914 = vsub.f32 %v219, %v913
    %v915 = vand.u32 %v914, 4294901760
    %916 = vmatpush1.msra.mxu0 %v915
    %917 = vmatprep.subr.mxu0 0.0
    %v918 = vand.u32 %v220, 4294901760
    %v919 = vsub.f32 %v220, %v918
    %v920 = vand.u32 %v919, 4294901760
    %921 = vmatpush1.msra.mxu0 %v920
    %922 = vmatprep.subr.mxu0 0.0
    %v923 = vand.u32 %v221, 4294901760
    %v924 = vsub.f32 %v221, %v923
    %v925 = vand.u32 %v924, 4294901760
    %926 = vmatpush1.msra.mxu0 %v925
    %927 = vmatprep.subr.mxu0 0.0
    %v928 = vand.u32 %v222, 4294901760
    %v929 = vsub.f32 %v222, %v928
    %v930 = vand.u32 %v929, 4294901760
    %931 = vmatpush1.msra.mxu0 %v930
    %932 = vmatprep.subr.mxu0 0.0
    %v933 = vand.u32 %v223, 4294901760
    %v934 = vsub.f32 %v223, %v933
    %v935 = vand.u32 %v934, 4294901760
    %936 = vmatpush1.msra.mxu0 %v935
    %937 = vmatprep.subr.mxu0 0.0
    %v938 = vand.u32 %v224, 4294901760
    %v939 = vsub.f32 %v224, %v938
    %v940 = vand.u32 %v939, 4294901760
    %941 = vmatpush1.msra.mxu0 %v940
    %942 = vmatprep.subr.mxu0 0.0
    %v943 = vand.u32 %v225, 4294901760
    %v944 = vsub.f32 %v225, %v943
    %v945 = vand.u32 %v944, 4294901760
    %946 = vmatpush1.msra.mxu0 %v945
    %947 = vmatprep.subr.mxu0 0.0
    %v948 = vand.u32 %v226, 4294901760
    %v949 = vsub.f32 %v226, %v948
    %v950 = vand.u32 %v949, 4294901760
    %951 = vmatpush1.msra.mxu0 %v950
    %952 = vmatprep.subr.mxu0 0.0
    %v953 = vand.u32 %v227, 4294901760
    %v954 = vsub.f32 %v227, %v953
    %v955 = vand.u32 %v954, 4294901760
    %956 = vmatpush1.msra.mxu0 %v955
    %957 = vmatprep.subr.mxu0 0.0
    %v958 = vand.u32 %v228, 4294901760
    %v959 = vsub.f32 %v228, %v958
    %v960 = vand.u32 %v959, 4294901760
    %961 = vmatpush1.msra.mxu0 %v960
    %962 = vmatprep.subr.mxu0 0.0
    %v963 = vand.u32 %v229, 4294901760
    %v964 = vsub.f32 %v229, %v963
    %v965 = vand.u32 %v964, 4294901760
    %966 = vmatpush1.msra.mxu0 %v965
    %967 = vmatprep.subr.mxu0 0.0
    %v968 = vand.u32 %v230, 4294901760
    %v969 = vsub.f32 %v230, %v968
    %v970 = vand.u32 %v969, 4294901760
    %971 = vmatpush1.msra.mxu0 %v970
    %972 = vmatprep.subr.mxu0 0.0
    %v973 = vand.u32 %v231, 4294901760
    %v974 = vsub.f32 %v231, %v973
    %v975 = vand.u32 %v974, 4294901760
    %976 = vmatpush1.msra.mxu0 %v975
    %977 = vmatprep.subr.mxu0 0.0
    %v978 = vand.u32 %v232, 4294901760
    %v979 = vsub.f32 %v232, %v978
    %v980 = vand.u32 %v979, 4294901760
    %981 = vmatpush1.msra.mxu0 %v980
    %982 = vmatprep.subr.mxu0 0.0
    %v983 = vand.u32 %v233, 4294901760
    %v984 = vsub.f32 %v233, %v983
    %v985 = vand.u32 %v984, 4294901760
    %986 = vmatpush1.msra.mxu0 %v985
    %v987 = vand.u32 %v235, 4294901760
    %988 = vmatprep.mubr.f32.mxu0 %v987
    %v989 = vand.u32 %v234, 4294901760
    %990 = vmatmul.mubr.f32.gmra.mrb[0].mxu0 %v989
    %v991 = vpop.f32.mrb[0].mxu0
    %v992 = vadd.f32 %v824, %v991
    %v993 = vpop.f32.mrb[0].mxu0
    %994 = vdwg.mxu0
    %995 = vmatprep.subr.mxu0 0.0
    %v996 = vand.u32 %v202, 4294901760
    %997 = vmatpush1.msra.mxu0 %v996
    %998 = vmatprep.subr.mxu0 0.0
    %v999 = vand.u32 %v203, 4294901760
    %1000 = vmatpush1.msra.mxu0 %v999
    %1001 = vmatprep.subr.mxu0 0.0
    %v1002 = vand.u32 %v204, 4294901760
    %1003 = vmatpush1.msra.mxu0 %v1002
    %1004 = vmatprep.subr.mxu0 0.0
    %v1005 = vand.u32 %v205, 4294901760
    %1006 = vmatpush1.msra.mxu0 %v1005
    %1007 = vmatprep.subr.mxu0 0.0
    %v1008 = vand.u32 %v206, 4294901760
    %1009 = vmatpush1.msra.mxu0 %v1008
    %1010 = vmatprep.subr.mxu0 0.0
    %v1011 = vand.u32 %v207, 4294901760
    %1012 = vmatpush1.msra.mxu0 %v1011
    %1013 = vmatprep.subr.mxu0 0.0
    %v1014 = vand.u32 %v208, 4294901760
    %1015 = vmatpush1.msra.mxu0 %v1014
    %1016 = vmatprep.subr.mxu0 0.0
    %v1017 = vand.u32 %v209, 4294901760
    %1018 = vmatpush1.msra.mxu0 %v1017
    %1019 = vmatprep.subr.mxu0 0.0
    %v1020 = vand.u32 %v210, 4294901760
    %1021 = vmatpush1.msra.mxu0 %v1020
    %1022 = vmatprep.subr.mxu0 0.0
    %v1023 = vand.u32 %v211, 4294901760
    %1024 = vmatpush1.msra.mxu0 %v1023
    %1025 = vmatprep.subr.mxu0 0.0
    %v1026 = vand.u32 %v212, 4294901760
    %1027 = vmatpush1.msra.mxu0 %v1026
    %1028 = vmatprep.subr.mxu0 0.0
    %v1029 = vand.u32 %v213, 4294901760
    %1030 = vmatpush1.msra.mxu0 %v1029
    %1031 = vmatprep.subr.mxu0 0.0
    %v1032 = vand.u32 %v214, 4294901760
    %1033 = vmatpush1.msra.mxu0 %v1032
    %1034 = vmatprep.subr.mxu0 0.0
    %v1035 = vand.u32 %v215, 4294901760
    %1036 = vmatpush1.msra.mxu0 %v1035
    %1037 = vmatprep.subr.mxu0 0.0
    %v1038 = vand.u32 %v216, 4294901760
    %1039 = vmatpush1.msra.mxu0 %v1038
    %1040 = vmatprep.subr.mxu0 0.0
    %v1041 = vand.u32 %v217, 4294901760
    %1042 = vmatpush1.msra.mxu0 %v1041
    %1043 = vmatprep.subr.mxu0 0.0
    %v1044 = vand.u32 %v218, 4294901760
    %1045 = vmatpush1.msra.mxu0 %v1044
    %1046 = vmatprep.subr.mxu0 0.0
    %v1047 = vand.u32 %v219, 4294901760
    %1048 = vmatpush1.msra.mxu0 %v1047
    %1049 = vmatprep.subr.mxu0 0.0
    %v1050 = vand.u32 %v220, 4294901760
    %1051 = vmatpush1.msra.mxu0 %v1050
    %1052 = vmatprep.subr.mxu0 0.0
    %v1053 = vand.u32 %v221, 4294901760
    %1054 = vmatpush1.msra.mxu0 %v1053
    %1055 = vmatprep.subr.mxu0 0.0
    %v1056 = vand.u32 %v222, 4294901760
    %1057 = vmatpush1.msra.mxu0 %v1056
    %1058 = vmatprep.subr.mxu0 0.0
    %v1059 = vand.u32 %v223, 4294901760
    %1060 = vmatpush1.msra.mxu0 %v1059
    %1061 = vmatprep.subr.mxu0 0.0
    %v1062 = vand.u32 %v224, 4294901760
    %1063 = vmatpush1.msra.mxu0 %v1062
    %1064 = vmatprep.subr.mxu0 0.0
    %v1065 = vand.u32 %v225, 4294901760
    %1066 = vmatpush1.msra.mxu0 %v1065
    %1067 = vmatprep.subr.mxu0 0.0
    %v1068 = vand.u32 %v226, 4294901760
    %1069 = vmatpush1.msra.mxu0 %v1068
    %1070 = vmatprep.subr.mxu0 0.0
    %v1071 = vand.u32 %v227, 4294901760
    %1072 = vmatpush1.msra.mxu0 %v1071
    %1073 = vmatprep.subr.mxu0 0.0
    %v1074 = vand.u32 %v228, 4294901760
    %1075 = vmatpush1.msra.mxu0 %v1074
    %1076 = vmatprep.subr.mxu0 0.0
    %v1077 = vand.u32 %v229, 4294901760
    %1078 = vmatpush1.msra.mxu0 %v1077
    %1079 = vmatprep.subr.mxu0 0.0
    %v1080 = vand.u32 %v230, 4294901760
    %1081 = vmatpush1.msra.mxu0 %v1080
    %1082 = vmatprep.subr.mxu0 0.0
    %v1083 = vand.u32 %v231, 4294901760
    %1084 = vmatpush1.msra.mxu0 %v1083
    %1085 = vmatprep.subr.mxu0 0.0
    %v1086 = vand.u32 %v232, 4294901760
    %1087 = vmatpush1.msra.mxu0 %v1086
    %1088 = vmatprep.subr.mxu0 0.0
    %v1089 = vand.u32 %v233, 4294901760
    %1090 = vmatpush1.msra.mxu0 %v1089
    %v1091 = vand.u32 %v235, 4294901760
    %1092 = vmatprep.mubr.f32.mxu0 %v1091
    %v1093 = vand.u32 %v234, 4294901760
    %1094 = vmatmul.mubr.f32.gmra.mrb[0].mxu0 %v1093
    %v1095 = vpop.f32.mrb[0].mxu0
    %v1096 = vadd.f32 %v992, %v1095
    %v1097 = vpop.f32.mrb[0].mxu0
    %1098 = vdwg.mxu0
    %v1099 = vmul.f32 %v1096, 0.5
    %v1100 = vtanh.pop %v1099
    %v1101 = vadd.f32 %v1100, 1.0
    %v1102 = vmul.f32 %v1101, 0.5
    %vm1103 = vcmp.eq.s32.totalorder %v236, 1
    %v1104 = vsub.f32 1.0, %v1102
    %v1105 = vsel %vm1103, %v1102, %v1104
    %v1106 = vmax.f32 %v1105, 0.0001
    %v1107 = vmin.f32 %v1106, 1.0
    %v1108 = vlog2.pop %v1107
    %v1109 = vmul.f32 %v1108, 0.6931472
    %v1110 = vsel %vm1103, 0.4, 0.6
    %v1111 = vsub.f32 0.0, %v1110
    %v1112 = vsub.f32 1.0, %v1107
    %v1113 = vmul.f32 %v1112, %v1112
    %v1114 = vmul.f32 %v1111, %v1113
    %v1115 = vmul.f32 %v1114, %v1109
    %v1116 = vmul.u32 %v38, 128
    %v1117 = vstv %s36
    %v1118 = vadd.s32 %v1117, %v1116
    %v1119 = vadd.s32 %v1118, %v71
    %vm1120 = vcmp.lt.s32.totalorder %v1119, 200
    %v1121 = vsel %vm1120, %v1115, 0.0
    %v1122 = vadd.f32 %v1121, 0.0
    %1123 = vst [vmem:[#allocation7] sm:$0xff] %v1122
    // Predicated region
    $region18: #{tpu_custom_call.1} parent=1 // pred_check
      _
    $region19: #{tpu_custom_call.1} parent=1 // pred_check_branch
      %1125 = sbr.rel (0) target = $region21
    $region20: #{tpu_custom_call.1} parent=1 // pred_region
      %s1127 = ssub.s32 128, 128
      %1128 = vsyncadd [#allocation4], %s1127
      %s1130 = sshll.u32 [#allocation7], 4
      %s1131 = int_to_ptr.vmem [resolvable:$true] %s1130
      %1133 = dma.vmem_to_hbm [thread:$0]  %s1131, 128, %s2, [#allocation4]
    $region21: #{tpu_custom_call.1} parent=1 // pred_fallthru
      _
    // Predicated region
    $region22: #{tpu_custom_call.1} parent=1 // pred_check
      _
    $region23: #{tpu_custom_call.1} parent=1 // pred_check_branch
      %1135 = sbr.rel (0) target = $region25
    $region24: #{tpu_custom_call.1} parent=1 // pred_region
      %1136 = dma.done [#allocation4], 128
    $region25: #{tpu_custom_call.1} parent=1 // pred_fallthru
      _
    %1137 = vsyncpa [#allocation3], 1
    %1138 = vsyncpa [#allocation6], 1
    %1139 = vsyncpa [#allocation4], 1

</llo_original>
